<compile_context>
chip_gen: v7x
topology: tpu7x:2x2x1
jax: 0.10.0
libtpu: 0.0.40
codegen_flags: <defaults>
</compile_context>

<pallas_src>
import functools

import jax
import jax.numpy as jnp
from jax.experimental import pallas as pl
from jax.experimental.pallas import tpu as pltpu


def mlp_logsoftmax_kernel(x_ref, w1_ref, b1_ref, w2_ref, b2_ref, o_ref):
    # x_ref: (10, TB)  w1_ref: (5, 10)  b1_ref: (5, 1)
    # w2_ref: (2, 5)   b2_ref: (2, 1)   o_ref: (2, TB)
    x = x_ref[...]
    h = jnp.dot(w1_ref[...], x, preferred_element_type=jnp.float32)    # (5, TB)
    h = jnp.maximum(h + b1_ref[...], 0.0)                              # ReLU
    z = jnp.dot(w2_ref[...], h, preferred_element_type=jnp.float32)    # (2, TB)
    z = z + b2_ref[...]
    # 2-class log_softmax along the class axis (axis 0), specialized:
    #   log_softmax(z)[0] = -softplus(z1 - z0)
    #   log_softmax(z)[1] =  (z1 - z0) - softplus(z1 - z0)
    d = z[1:2, :] - z[0:1, :]                                          # (1, TB)
    # (log(1+exp(-|d|)) is accurate enough at 1e-5; log1p would be marginal.)
    sp = jnp.maximum(d, 0.0) + jnp.log(1.0 + jnp.exp(-jnp.abs(d)))     # softplus
    # Direct row stores instead of a sublane concatenate.
    # TODO(synk): if a v7x bundle dump ever shows EUP/VALU co-critical with the
    # DMA, restructure this tail sublane-dense (d occupies only 1/8 sublanes).
    o_ref[0:1, :] = -sp
    o_ref[1:2, :] = d - sp


def _round_up(n, m):
    return ((n + m - 1) // m) * m


@functools.partial(jax.jit, static_argnames=("tile_b", "class_major"))
def simple_model_forward(x, w1, b1, w2, b2, *, tile_b=32768, class_major=False):
    """Fused SimpleModel forward.

    x: (B, 10); w1: (5, 10); b1: (5,); w2: (2, 5); b2: (2,)   (PyTorch layouts)
    Returns (B, 2) log-probs, or (2, B) when class_major=True (skips the
    trailing output transpose for downstream consumers that accept it).
    """
    B = x.shape[0]
    bp128 = _round_up(B, 128)

    # Lane-aligned batch tile: as large as possible (amortizes the ~0.35 us
    # per-grid-step overhead) but capped so the grid keeps >= 2 steps when the
    # batch allows, letting dimension_semantics=("parallel",) spread steps
    # across v7x's 2 TensorCores.
    tb = min(_round_up(max(tile_b, 128), 128), bp128)
    if bp128 >= 256 and tb > bp128 // 2:
        tb = max(128, (bp128 // 2) // 128 * 128)
    Bp = _round_up(B, tb)

    xt = x.astype(jnp.float32).T                    # (10, B): batch-on-lanes
    # TODO(synk): callers that can keep x feature-major (10, B) upstream should
    # pass it in that layout and skip this relayout pass entirely.
    if Bp != B:
        xt = jnp.pad(xt, ((0, 0), (0, Bp - B)))     # pad cols are zeros
    b1c = b1.reshape(5, 1).astype(jnp.float32)
    b2c = b2.reshape(2, 1).astype(jnp.float32)

    # Per-step VMEM (double-buffered): x^T block 16(sublane-pad)*tb*4*2 +
    # out 8*tb*4*2 = 192*tb bytes (~6 MiB at tb=32768); 32 MiB limit leaves
    # headroom up to tile_b=65536 and is safe on v5e/v6e/v7x.
    out_t = pl.pallas_call(
        mlp_logsoftmax_kernel,
        out_shape=jax.ShapeDtypeStruct((2, Bp), jnp.float32),
        grid_spec=pltpu.PrefetchScalarGridSpec(
            num_scalar_prefetch=0,
            grid=(Bp // tb,),
            in_specs=[
                pl.BlockSpec((10, tb), lambda i: (0, i)),   # x^T tile (lane-dense)
                pl.BlockSpec((5, 10), lambda i: (0, 0)),    # w1, VMEM-resident
                pl.BlockSpec((5, 1), lambda i: (0, 0)),     # b1
                pl.BlockSpec((2, 5), lambda i: (0, 0)),     # w2
                pl.BlockSpec((2, 1), lambda i: (0, 0)),     # b2
            ],
            out_specs=pl.BlockSpec((2, tb), lambda i: (0, i)),
        ),
        compiler_params=pltpu.CompilerParams(
            dimension_semantics=("parallel",),
            vmem_limit_bytes=32 * 1024 * 1024,
        ),
        cost_estimate=pl.CostEstimate(
            flops=2 * Bp * (10 * 5 + 5 * 2),
            transcendentals=2 * Bp,
            # Padded traffic: x^T read as 16 sublanes, output written as 8,
            # plus the four small weight/bias tiles.
            bytes_accessed=4 * (16 * Bp + 8 * Bp) + 16384,
        ),
    )(xt, w1.astype(jnp.float32), b1c, w2.astype(jnp.float32), b2c)

    out_t = out_t[:, :B]                            # drop batch padding
    if class_major:
        return out_t                                # (2, B), lane-dense
    return out_t.T                                  # (B, 2), module layout


def init_params(key):
    """Deterministic init mimicking PyTorch's uniform(-1/sqrt(fan_in), ...)."""
    k1, k2, k3, k4 = jax.random.split(key, 4)
    bound1 = 1.0 / jnp.sqrt(10.0)
    bound2 = 1.0 / jnp.sqrt(5.0)
    w1 = jax.random.uniform(k1, (5, 10), jnp.float32, -bound1, bound1)  # (out, in)
    b1 = jax.random.uniform(k2, (5,), jnp.float32, -bound1, bound1)
    w2 = jax.random.uniform(k3, (2, 5), jnp.float32, -bound2, bound2)
    b2 = jax.random.uniform(k4, (2,), jnp.float32, -bound2, bound2)
    return w1, b1, w2, b2


def _reference(x, w1, b1, w2, b2):
    h = jnp.maximum(x @ w1.T + b1, 0.0)
    z = h @ w2.T + b2
    return jax.nn.log_softmax(z, axis=1)


if __name__ == "__main__":
    key = jax.random.PRNGKey(0)
    kx, kp, kx2, kx3 = jax.random.split(key, 4)
    w1, b1, w2, b2 = init_params(kp)

    # Small demo batch.
    batch = 8
    x = jax.random.normal(kx, (batch, 10), dtype=jnp.float32)
    out = simple_model_forward(x, w1, b1, w2, b2)
    jax.block_until_ready(out)
    ref = _reference(x, w1, b1, w2, b2)
    assert out.shape == (batch, 2)
    assert jnp.allclose(out, ref, atol=1e-5), "mismatch vs reference (batch=8)"

    # Class-major fast path (skips the output transpose).
    out_cm = simple_model_forward(x, w1, b1, w2, b2, class_major=True)
    jax.block_until_ready(out_cm)
    assert out_cm.shape == (2, batch)
    assert jnp.allclose(out_cm.T, ref, atol=1e-5), "mismatch vs reference (class_major)"

    # Multi-tile grid + remainder padding (B not a multiple of the tile).
    batch2 = 300
    x2 = jax.random.normal(kx2, (batch2, 10), dtype=jnp.float32)
    out2 = simple_model_forward(x2, w1, b1, w2, b2, tile_b=128)
    jax.block_until_ready(out2)
    ref2 = _reference(x2, w1, b1, w2, b2)
    assert out2.shape == (batch2, 2)
    assert jnp.allclose(out2, ref2, atol=1e-5), "mismatch vs reference (batch=300)"

    # Default tile path exercising the ">= 2 grid steps" cap (tb=512, grid=2).
    batch3 = 1024
    x3 = jax.random.normal(kx3, (batch3, 10), dtype=jnp.float32)
    out3 = simple_model_forward(x3, w1, b1, w2, b2)
    jax.block_until_ready(out3)
    ref3 = _reference(x3, w1, b1, w2, b2)
    assert out3.shape == (batch3, 2)
    assert jnp.allclose(out3, ref3, atol=1e-5), "mismatch vs reference (batch=1024)"

    print("KERNEL_OK")
</pallas_src>

<mosaic_0001>
module attributes {stable_mosaic.version = 11 : i64} {
  func.func @mlp_logsoftmax_kernel(%arg0: i32, %arg1: memref<10x128xf32, #tpu.memory_space<vmem>>, %arg2: memref<5x10xf32, #tpu.memory_space<vmem>>, %arg3: memref<5x1xf32, #tpu.memory_space<vmem>>, %arg4: memref<2x5xf32, #tpu.memory_space<vmem>>, %arg5: memref<2x1xf32, #tpu.memory_space<vmem>>, %arg6: memref<2x128xf32, #tpu.memory_space<vmem>>) attributes {dimension_semantics = [#tpu.dimension_semantics<parallel>], iteration_bounds = array<i64: 1>, scalar_prefetch = 0 : i64, scratch_operands = 0 : i64, tpu.core_type = #tpu.core_type<tc>, window_params = [{transform_indices = @transform_0, window_bounds = array<i64: 10, 128>}, {pipeline_mode = #tpu.pipeline_mode<synchronous>, transform_indices = @transform_1, window_bounds = array<i64: 5, 10>}, {pipeline_mode = #tpu.pipeline_mode<synchronous>, transform_indices = @transform_2, window_bounds = array<i64: 5, 1>}, {pipeline_mode = #tpu.pipeline_mode<synchronous>, transform_indices = @transform_3, window_bounds = array<i64: 2, 5>}, {pipeline_mode = #tpu.pipeline_mode<synchronous>, transform_indices = @transform_4, window_bounds = array<i64: 2, 1>}, {transform_indices = @transform_5, window_bounds = array<i64: 2, 128>}]} {
    %c0 = arith.constant 0 : index
    %c0_0 = arith.constant 0 : index
    %0 = vector.load %arg1[%c0, %c0_0] : memref<10x128xf32, #tpu.memory_space<vmem>>, vector<10x128xf32>
    %c0_1 = arith.constant 0 : index
    %c0_2 = arith.constant 0 : index
    %1 = vector.load %arg2[%c0_1, %c0_2] : memref<5x10xf32, #tpu.memory_space<vmem>>, vector<5x10xf32>
    %cst = arith.constant dense<0.000000e+00> : vector<5x128xf32>
    %2 = tpu.matmul %1, %0, %cst {dimension_numbers = #tpu.dot_dimension_numbers<[1], [0], [0], [1], [0, 0, 1, 1], [], []>} : vector<5x10xf32>, vector<10x128xf32>, vector<5x128xf32> -> vector<5x128xf32>
    %c0_3 = arith.constant 0 : index
    %c0_4 = arith.constant 0 : index
    %3 = vector.load %arg3[%c0_3, %c0_4] : memref<5x1xf32, #tpu.memory_space<vmem>>, vector<5x1xf32>
    %4 = vector.broadcast %3 : vector<5x1xf32> to vector<5x128xf32>
    %5 = arith.addf %2, %4 : vector<5x128xf32>
    %cst_5 = arith.constant 0.000000e+00 : f32
    %6 = vector.broadcast %cst_5 : f32 to vector<5x128xf32>
    %7 = arith.maximumf %5, %6 : vector<5x128xf32>
    %c0_6 = arith.constant 0 : index
    %c0_7 = arith.constant 0 : index
    %8 = vector.load %arg4[%c0_6, %c0_7] : memref<2x5xf32, #tpu.memory_space<vmem>>, vector<2x5xf32>
    %cst_8 = arith.constant dense<0.000000e+00> : vector<2x128xf32>
    %9 = tpu.matmul %8, %7, %cst_8 {dimension_numbers = #tpu.dot_dimension_numbers<[1], [0], [0], [1], [0, 0, 1, 1], [], []>} : vector<2x5xf32>, vector<5x128xf32>, vector<2x128xf32> -> vector<2x128xf32>
    %c0_9 = arith.constant 0 : index
    %c0_10 = arith.constant 0 : index
    %10 = vector.load %arg5[%c0_9, %c0_10] : memref<2x1xf32, #tpu.memory_space<vmem>>, vector<2x1xf32>
    %11 = vector.broadcast %10 : vector<2x1xf32> to vector<2x128xf32>
    %12 = arith.addf %9, %11 : vector<2x128xf32>
    %13 = vector.extract_strided_slice %12 {offsets = [1, 0], sizes = [1, 128], strides = [1, 1]} : vector<2x128xf32> to vector<1x128xf32>
    %14 = vector.extract_strided_slice %12 {offsets = [0, 0], sizes = [1, 128], strides = [1, 1]} : vector<2x128xf32> to vector<1x128xf32>
    %15 = arith.subf %13, %14 : vector<1x128xf32>
    %cst_11 = arith.constant 0.000000e+00 : f32
    %16 = vector.broadcast %cst_11 : f32 to vector<1x128xf32>
    %17 = arith.maximumf %15, %16 : vector<1x128xf32>
    %18 = math.absf %15 : vector<1x128xf32>
    %cst_12 = arith.constant 0.000000e+00 : f32
    %19 = vector.broadcast %cst_12 : f32 to vector<1x128xf32>
    %20 = arith.subf %19, %18 : vector<1x128xf32>
    %21 = math.exp %20 : vector<1x128xf32>
    %cst_13 = arith.constant 1.000000e+00 : f32
    %22 = vector.broadcast %cst_13 : f32 to vector<1x128xf32>
    %23 = arith.addf %22, %21 : vector<1x128xf32>
    %24 = math.log %23 : vector<1x128xf32>
    %25 = arith.addf %17, %24 : vector<1x128xf32>
    %cst_14 = arith.constant 0.000000e+00 : f32
    %26 = vector.broadcast %cst_14 : f32 to vector<1x128xf32>
    %27 = arith.subf %26, %25 : vector<1x128xf32>
    %c0_15 = arith.constant 0 : index
    %c0_16 = arith.constant 0 : index
    %28 = vector.load %arg6[%c0_15, %c0_16] : memref<2x128xf32, #tpu.memory_space<vmem>>, vector<1x128xf32>
    tpu.vector_store %arg6[%c0_15, %c0_16], %27 {strides = array<i32>} : memref<2x128xf32, #tpu.memory_space<vmem>>, vector<1x128xf32>,
    %29 = arith.subf %15, %25 : vector<1x128xf32>
    %c1 = arith.constant 1 : index
    %c0_17 = arith.constant 0 : index
    %30 = vector.load %arg6[%c1, %c0_17] : memref<2x128xf32, #tpu.memory_space<vmem>>, vector<1x128xf32>
    tpu.vector_store %arg6[%c1, %c0_17], %29 {strides = array<i32>} : memref<2x128xf32, #tpu.memory_space<vmem>>, vector<1x128xf32>,
    return
  }
  func.func @transform_0(%arg0: i32) -> (i32, i32) {
    %c0_i32 = arith.constant 0 : i32
    %c0_i32_0 = arith.constant 0 : i32
    return %c0_i32, %arg0 : i32, i32
  }
  func.func @transform_1(%arg0: i32) -> (i32, i32) {
    %c0_i32 = arith.constant 0 : i32
    %c0_i32_0 = arith.constant 0 : i32
    %c0_i32_1 = arith.constant 0 : i32
    return %c0_i32, %c0_i32_0 : i32, i32
  }
  func.func @transform_2(%arg0: i32) -> (i32, i32) {
    %c0_i32 = arith.constant 0 : i32
    %c0_i32_0 = arith.constant 0 : i32
    %c0_i32_1 = arith.constant 0 : i32
    return %c0_i32, %c0_i32_0 : i32, i32
  }
  func.func @transform_3(%arg0: i32) -> (i32, i32) {
    %c0_i32 = arith.constant 0 : i32
    %c0_i32_0 = arith.constant 0 : i32
    %c0_i32_1 = arith.constant 0 : i32
    return %c0_i32, %c0_i32_0 : i32, i32
  }
  func.func @transform_4(%arg0: i32) -> (i32, i32) {
    %c0_i32 = arith.constant 0 : i32
    %c0_i32_0 = arith.constant 0 : i32
    %c0_i32_1 = arith.constant 0 : i32
    return %c0_i32, %c0_i32_0 : i32, i32
  }
  func.func @transform_5(%arg0: i32) -> (i32, i32) {
    %c0_i32 = arith.constant 0 : i32
    %c0_i32_0 = arith.constant 0 : i32
    return %c0_i32, %arg0 : i32, i32
  }
}

</mosaic_0001>

<llo_original>
// kernel: simple_model_forward.1
$region0: #{simple_model_forward.1}
  #allocation0 [shape = 'u32[]', space=smem, size = 0x4, offset = 0x4, fixed_abs, tag = 'smem constant byte address 0x4 - core index']
  #allocation1 [shape = 'u32[144,128]{1,0:T(1,128)}', space=vmem, size = 0x12000, scoped, tag = 'internal scratch']
  %s0 = inlined_call_operand.vmem [shape: f32[10,128], index: 0, kind: input, shape index: {}]
  %s1 = inlined_call_operand.vmem [shape: f32[5,10], index: 1, kind: input, shape index: {}]
  %s2 = inlined_call_operand.vmem [shape: f32[5,1], index: 2, kind: input, shape index: {}]
  %s3 = inlined_call_operand.vmem [shape: f32[2,5], index: 3, kind: input, shape index: {}]
  %s4 = inlined_call_operand.vmem [shape: f32[2,1], index: 4, kind: input, shape index: {}]
  %s5 = inlined_call_operand.vmem [shape: f32[2,128], index: 5, kind: output, shape index: {}]
  %s6 = sld [smem:[#allocation0]]
  $region30: #{simple_model_forward.1} parent=0
    _
  %s8 = ssub.s32 1, %s6
  %s9 = scalar_select 0, %s8, %s6
  // Predicated region
  $region2: #{simple_model_forward.1} parent=0 // pred_check
    _
  $region3: #{simple_model_forward.1} parent=0 // pred_check_branch
    %11 = sbr.rel (0) target = $region5
  $region4: #{simple_model_forward.1} parent=0 // pred_region
    _
  $region5: #{simple_model_forward.1} parent=0 // pred_fallthru
    _
  // Predicated region
  $region6: #{simple_model_forward.1} parent=0 // pred_check
    _
  $region7: #{simple_model_forward.1} parent=0 // pred_check_branch
    %13 = sbr.rel (0) target = $region9
  $region8: #{simple_model_forward.1} parent=0 // pred_region
    _
  $region9: #{simple_model_forward.1} parent=0 // pred_fallthru
    _
  // Predicated region
  $region10: #{simple_model_forward.1} parent=0 // pred_check
    _
  $region11: #{simple_model_forward.1} parent=0 // pred_check_branch
    %15 = sbr.rel (0) target = $region13
  $region12: #{simple_model_forward.1} parent=0 // pred_region
    _
  $region13: #{simple_model_forward.1} parent=0 // pred_fallthru
    _
  // Predicated region
  $region14: #{simple_model_forward.1} parent=0 // pred_check
    _
  $region15: #{simple_model_forward.1} parent=0 // pred_check_branch
    %17 = sbr.rel (0) target = $region17
  $region16: #{simple_model_forward.1} parent=0 // pred_region
    _
  $region17: #{simple_model_forward.1} parent=0 // pred_fallthru
    _
  // Predicated region
  $region18: #{simple_model_forward.1} parent=0 // pred_check
    _
  $region19: #{simple_model_forward.1} parent=0 // pred_check_branch
    %19 = sbr.rel (0) target = $region21
  $region20: #{simple_model_forward.1} parent=0 // pred_region
    _
  $region21: #{simple_model_forward.1} parent=0 // pred_fallthru
    _
  %v20 = vld [vmem:[%s0] sm:$0xff]
  %v21 = vld [vmem:[%s0 + $0x8] sm:$0x3]
  %v22 = vld [vmem:[%s1] sm:$0x1f]
  %v23 = vld [vmem:[%s2] sm:$0x1f]
  %25 = vset.pattern.permute.xlu0 0
  %26 = vperm.xlu0 %25, %v23
  %v27 = vpop.permute.xlu0 %26
  %vm29 = vcmask 80896
  %v31 = vsel %vm29, %v22, 0
  %vm33 = vcmask 1041408
  %v35 = vsel %vm33, %v21, 0
  %37 = vmatprep.subr.mxu0 0.0
  %38 = vmatpush1.msra.mxu0 %v20
  %39 = vmatprep.subr.mxu0 0.0
  %40 = vmatpush1.msra.mxu0 %v35
  %41 = vmatprep.subr.mxu0 0.0
  %42 = vmatpush1.msra.mxu0 0.0
  %43 = vmatprep.subr.mxu0 0.0
  %44 = vmatpush1.msra.mxu0 0.0
  %45 = vmatprep.subr.mxu0 0.0
  %46 = vmatpush1.msra.mxu0 0.0
  %47 = vmatprep.subr.mxu0 0.0
  %48 = vmatpush1.msra.mxu0 0.0
  %49 = vmatprep.subr.mxu0 0.0
  %50 = vmatpush1.msra.mxu0 0.0
  %51 = vmatprep.subr.mxu0 0.0
  %52 = vmatpush1.msra.mxu0 0.0
  %53 = vmatprep.subr.mxu0 0.0
  %54 = vmatpush1.msra.mxu0 0.0
  %55 = vmatprep.subr.mxu0 0.0
  %56 = vmatpush1.msra.mxu0 0.0
  %57 = vmatprep.subr.mxu0 0.0
  %58 = vmatpush1.msra.mxu0 0.0
  %59 = vmatprep.subr.mxu0 0.0
  %60 = vmatpush1.msra.mxu0 0.0
  %61 = vmatprep.subr.mxu0 0.0
  %62 = vmatpush1.msra.mxu0 0.0
  %63 = vmatprep.subr.mxu0 0.0
  %64 = vmatpush1.msra.mxu0 0.0
  %65 = vmatprep.subr.mxu0 0.0
  %66 = vmatpush1.msra.mxu0 0.0
  %67 = vmatprep.subr.mxu0 0.0
  %68 = vmatpush1.msra.mxu0 0.0
  %69 = vmatprep.subr.mxu0 0.0
  %70 = vmatpush1.msra.mxu0 0.0
  %71 = vmatprep.subr.mxu0 0.0
  %72 = vmatpush1.msra.mxu0 0.0
  %73 = vmatprep.subr.mxu0 0.0
  %74 = vmatpush1.msra.mxu0 0.0
  %75 = vmatprep.subr.mxu0 0.0
  %76 = vmatpush1.msra.mxu0 0.0
  %77 = vmatprep.subr.mxu0 0.0
  %78 = vmatpush1.msra.mxu0 0.0
  %79 = vmatprep.subr.mxu0 0.0
  %80 = vmatpush1.msra.mxu0 0.0
  %81 = vmatprep.subr.mxu0 0.0
  %82 = vmatpush1.msra.mxu0 0.0
  %83 = vmatprep.subr.mxu0 0.0
  %84 = vmatpush1.msra.mxu0 0.0
  %85 = vmatprep.subr.mxu0 0.0
  %86 = vmatpush1.msra.mxu0 0.0
  %87 = vmatprep.subr.mxu0 0.0
  %88 = vmatpush1.msra.mxu0 0.0
  %89 = vmatprep.subr.mxu0 0.0
  %90 = vmatpush1.msra.mxu0 0.0
  %91 = vmatprep.subr.mxu0 0.0
  %92 = vmatpush1.msra.mxu0 0.0
  %93 = vmatprep.subr.mxu0 0.0
  %94 = vmatpush1.msra.mxu0 0.0
  %95 = vmatprep.subr.mxu0 0.0
  %96 = vmatpush1.msra.mxu0 0.0
  %97 = vmatprep.subr.mxu0 0.0
  %98 = vmatpush1.msra.mxu0 0.0
  %99 = vmatprep.subr.mxu0 0.0
  %100 = vmatpush1.msra.mxu0 0.0
  %101 = vmatprep.mubr.f32.mxu0 0.0
  %102 = vmatmul.mubr.f32.gmra.mrb[0].mxu0 %v31
  %v103 = vpop.f32.mrb[0].mxu0
  %v104 = vadd.f32 %v27, %v103
  %v105 = vpop.f32.mrb[0].mxu0
  %106 = vdwg.mxu0
  %v107 = vmax.f32 %v104, 0.0
  %v108 = vld [vmem:[%s3] sm:$0x3]
  %v109 = vld [vmem:[%s4] sm:$0x3]
  %111 = vset.pattern.permute.xlu0 0
  %112 = vperm.xlu0 %111, %v109
  %v113 = vpop.permute.xlu0 %112
  %vm115 = vcmask 39936
  %v117 = vsel %vm115, %v108, 0
  %vm119 = vcmask 1044480
  %v121 = vsel %vm119, %v107, 0
  %123 = vmatprep.subr.mxu0 0.0
  %124 = vmatpush1.msra.mxu0 %v121
  %125 = vmatprep.subr.mxu0 0.0
  %126 = vmatpush1.msra.mxu0 0.0
  %127 = vmatprep.subr.mxu0 0.0
  %128 = vmatpush1.msra.mxu0 0.0
  %129 = vmatprep.subr.mxu0 0.0
  %130 = vmatpush1.msra.mxu0 0.0
  %131 = vmatprep.subr.mxu0 0.0
  %132 = vmatpush1.msra.mxu0 0.0
  %133 = vmatprep.subr.mxu0 0.0
  %134 = vmatpush1.msra.mxu0 0.0
  %135 = vmatprep.subr.mxu0 0.0
  %136 = vmatpush1.msra.mxu0 0.0
  %137 = vmatprep.subr.mxu0 0.0
  %138 = vmatpush1.msra.mxu0 0.0
  %139 = vmatprep.subr.mxu0 0.0
  %140 = vmatpush1.msra.mxu0 0.0
  %141 = vmatprep.subr.mxu0 0.0
  %142 = vmatpush1.msra.mxu0 0.0
  %143 = vmatprep.subr.mxu0 0.0
  %144 = vmatpush1.msra.mxu0 0.0
  %145 = vmatprep.subr.mxu0 0.0
  %146 = vmatpush1.msra.mxu0 0.0
  %147 = vmatprep.subr.mxu0 0.0
  %148 = vmatpush1.msra.mxu0 0.0
  %149 = vmatprep.subr.mxu0 0.0
  %150 = vmatpush1.msra.mxu0 0.0
  %151 = vmatprep.subr.mxu0 0.0
  %152 = vmatpush1.msra.mxu0 0.0
  %153 = vmatprep.subr.mxu0 0.0
  %154 = vmatpush1.msra.mxu0 0.0
  %155 = vmatprep.subr.mxu0 0.0
  %156 = vmatpush1.msra.mxu0 0.0
  %157 = vmatprep.subr.mxu0 0.0
  %158 = vmatpush1.msra.mxu0 0.0
  %159 = vmatprep.subr.mxu0 0.0
  %160 = vmatpush1.msra.mxu0 0.0
  %161 = vmatprep.subr.mxu0 0.0
  %162 = vmatpush1.msra.mxu0 0.0
  %163 = vmatprep.subr.mxu0 0.0
  %164 = vmatpush1.msra.mxu0 0.0
  %165 = vmatprep.subr.mxu0 0.0
  %166 = vmatpush1.msra.mxu0 0.0
  %167 = vmatprep.subr.mxu0 0.0
  %168 = vmatpush1.msra.mxu0 0.0
  %169 = vmatprep.subr.mxu0 0.0
  %170 = vmatpush1.msra.mxu0 0.0
  %171 = vmatprep.subr.mxu0 0.0
  %172 = vmatpush1.msra.mxu0 0.0
  %173 = vmatprep.subr.mxu0 0.0
  %174 = vmatpush1.msra.mxu0 0.0
  %175 = vmatprep.subr.mxu0 0.0
  %176 = vmatpush1.msra.mxu0 0.0
  %177 = vmatprep.subr.mxu0 0.0
  %178 = vmatpush1.msra.mxu0 0.0
  %179 = vmatprep.subr.mxu0 0.0
  %180 = vmatpush1.msra.mxu0 0.0
  %181 = vmatprep.subr.mxu0 0.0
  %182 = vmatpush1.msra.mxu0 0.0
  %183 = vmatprep.subr.mxu0 0.0
  %184 = vmatpush1.msra.mxu0 0.0
  %185 = vmatprep.subr.mxu0 0.0
  %186 = vmatpush1.msra.mxu0 0.0
  %187 = vmatprep.mubr.f32.mxu0 0.0
  %188 = vmatmul.mubr.f32.gmra.mrb[0].mxu0 %v117
  %v189 = vpop.f32.mrb[0].mxu0
  %v190 = vadd.f32 %v113, %v189
  %v191 = vpop.f32.mrb[0].mxu0
  %192 = vdwg.mxu0
  %v194 = vrot.slane %v190, 7
  %v196 = vsub.f32 %v190, %v194
  %v197 = vmax.f32 %v196, 0.0
  %v198 = vand.u32 2147483647, %v196
  %v199 = vsub.f32 0.0, %v198
  %v200 = vmul.f32 %v199, 1.442695
  %v201 = vpow.pop %v200
  %v202 = vadd.f32 %v201, 1.0
  %v203 = vlog2.pop %v202
  %v204 = vmul.f32 %v203, 0.6931472
  %v205 = vadd.f32 %v197, %v204
  %v206 = vsub.f32 0.0, %v205
  %207 = vst [vmem:[%s5 - $0x1] sm:$0x2] %v206
  %v208 = vsub.f32 %v196, %v205
  %209 = vst [vmem:[%s5] sm:$0x2] %v208
  // Predicated region
  $region22: #{simple_model_forward.1} parent=0 // pred_check
    _
  $region23: #{simple_model_forward.1} parent=0 // pred_check_branch
    %211 = sbr.rel (0) target = $region25
  $region24: #{simple_model_forward.1} parent=0 // pred_region
    _
  $region25: #{simple_model_forward.1} parent=0 // pred_fallthru
    _
  // Predicated region
  $region26: #{simple_model_forward.1} parent=0 // pred_check
    _
  $region27: #{simple_model_forward.1} parent=0 // pred_check_branch
    %213 = sbr.rel (0) target = $region29
  $region28: #{simple_model_forward.1} parent=0 // pred_region
    _
  $region29: #{simple_model_forward.1} parent=0 // pred_fallthru
    _

</llo_original>
